<compile_context>
chip_gen: v6e
topology: v6e:2x2x1
jax: 0.10.0
libtpu: 0.0.40
codegen_flags: <defaults>
</compile_context>

<pallas_src>
import jax
import jax.numpy as jnp
import numpy as np
from jax import lax
from jax.experimental import pallas as pl
from jax.experimental.pallas import tpu as pltpu

# ---------------------------------------------------------------------------
# Tiling configuration
# ---------------------------------------------------------------------------
_LANE_CANDIDATES = (1024, 512, 256, 128)   # lane-dense slab widths (multiples of 128)
_TARGET_TILE_ELEMS = 256 * 1024            # ~1 MiB f32 per input tile (v7x-safe)
_MAX_BLOCK_ROWS = 512                      # cap on sublane rows per block
_VMEM_LIMIT_BYTES = 32 * 1024 * 1024       # explicit scoped-VMEM limit (ok on v5e/v6e/v7x)


def _cparams(grid_rank):
    # Every grid step writes a disjoint output block (no carried accumulator),
    # so all axes are "parallel" -> megacore sharding on v7x; no-op on v5e/v6e.
    return pltpu.CompilerParams(
        dimension_semantics=("parallel",) * grid_rank,
        vmem_limit_bytes=_VMEM_LIMIT_BYTES,
    )


def _sublane(*arrays):
    """Sublane packing granularity: 8 (4-byte), 16 (2-byte), 32 (1-byte)."""
    itemsize = min(jnp.dtype(a.dtype).itemsize for a in arrays)
    return max(8, 32 // max(1, itemsize))


def _slab_plan(n, sub):
    """Pick (lanes, rows, block_rows, padded_n) for a flat length-n array viewed
    as a lane-dense (rows, lanes) slab tiled in (block_rows, lanes) blocks."""
    lanes = None
    for cand in _LANE_CANDIDATES:
        if n % (cand * sub) == 0:
            lanes = cand
            break
    if lanes is None:
        # Awkward size: pad the flat tail up to one (sub, 128) tile.
        # TODO(synk): a scalar-prefetched tail mask would avoid this extra HBM copy.
        lanes = 128
        padded_n = pl.cdiv(n, sub * 128) * (sub * 128)
    else:
        padded_n = n
    rows = padded_n // lanes

    max_rows = min(rows, _MAX_BLOCK_ROWS, _TARGET_TILE_ELEMS // lanes)
    max_rows = max(sub, (max_rows // sub) * sub)
    block_rows = sub
    for cand in range(max_rows, 0, -sub):
        if rows % cand == 0:           # exact tiling -> no edge blocks, no padding
            block_rows = cand
            break
    return lanes, rows, block_rows, padded_n


def _to_slab(x, lanes, padded_n):
    flat = x.reshape(-1)
    n = flat.shape[0]
    if padded_n != n:
        flat = jnp.pad(flat, (0, padded_n - n))   # fallback path only
    return flat.reshape(padded_n // lanes, lanes)


# ---------------------------------------------------------------------------
# In-kernel helpers
# ---------------------------------------------------------------------------
def _fold_partial(x):
    """Fold a 2-D f32 tile (R, L) into an (8, 128) partial-sum block using only
    element-wise adds of 8x128-aligned static slices (pure VPU work)."""
    r, l = x.shape
    if r % 8 == 0 and l % 128 == 0:
        acc = x[0:8, :]
        for k in range(1, r // 8):
            acc = acc + x[k * 8:(k + 1) * 8, :]
        out = acc[:, 0:128]
        for g in range(1, l // 128):
            out = out + acc[:, g * 128:(g + 1) * 128]
        return out
    # Ragged tile (degenerate shapes only): reduce fully, place scalar at [0, 0].
    s = jnp.sum(x)
    row = lax.broadcasted_iota(jnp.int32, (8, 128), 0)
    col = lax.broadcasted_iota(jnp.int32, (8, 128), 1)
    return jnp.where((row == 0) & (col == 0), s, jnp.float32(0.0))


# ---------------------------------------------------------------------------
# Kernels
# ---------------------------------------------------------------------------
def _l1_none_kernel(p_ref, t_ref, o_ref):
    o_ref[...] = jnp.abs(p_ref[...] - t_ref[...]).astype(o_ref.dtype)


def _l1_none_w_kernel(p_ref, t_ref, w_ref, o_ref):
    d = jnp.abs(p_ref[...] - t_ref[...])
    o_ref[...] = (d * w_ref[...]).astype(o_ref.dtype)


def _l1_sum_kernel(p_ref, t_ref, o_ref):
    p = p_ref[...].astype(jnp.float32)
    t = t_ref[...].astype(jnp.float32)
    o_ref[...] = _fold_partial(jnp.abs(p - t))


def _l1_sum_w_kernel(p_ref, t_ref, w_ref, loss_ref, wsum_ref):
    p = p_ref[...].astype(jnp.float32)
    t = t_ref[...].astype(jnp.float32)
    w = w_ref[...].astype(jnp.float32)
    loss_ref[...] = _fold_partial(jnp.abs(p - t) * w)
    wsum_ref[...] = _fold_partial(w)


# ---------------------------------------------------------------------------
# Pallas-backed primitives
# ---------------------------------------------------------------------------
def _l1_elementwise(pred, target, weight=None):
    """Element-wise |pred - target| (optionally * weight), shaped like pred."""
    arrays = [pred, target] + ([] if weight is None else [weight])
    out_dtype = jnp.result_type(*[a.dtype for a in arrays])
    n = pred.size
    lanes, rows, block_rows, padded_n = _slab_plan(n, _sublane(*arrays))
    slabs = [_to_slab(a, lanes, padded_n) for a in arrays]
    nblocks = rows // block_rows
    spec = pl.BlockSpec((block_rows, lanes), lambda i: (i, 0))
    kernel = _l1_none_kernel if weight is None else _l1_none_w_kernel

    out = pl.pallas_call(
        kernel,
        out_shape=jax.ShapeDtypeStruct((rows, lanes), out_dtype),
        grid_spec=pltpu.PrefetchScalarGridSpec(
            num_scalar_prefetch=0,
            grid=(nblocks,),
            in_specs=[spec] * len(slabs),
            out_specs=spec,
        ),
        compiler_params=_cparams(1),
    )(*slabs)

    if padded_n != n:
        out = out.reshape(-1)[:n]
    return out.reshape(pred.shape)


def _l1_sum(pred, target):
    """sum(|pred - target|) as an f32 scalar (one streaming pass)."""
    n = pred.size
    lanes, rows, block_rows, padded_n = _slab_plan(n, _sublane(pred, target))
    p = _to_slab(pred, lanes, padded_n)
    t = _to_slab(target, lanes, padded_n)
    nblocks = rows // block_rows
    in_spec = pl.BlockSpec((block_rows, lanes), lambda i: (i, 0))
    out_spec = pl.BlockSpec((8, 128), lambda i: (i, 0))

    partials = pl.pallas_call(
        _l1_sum_kernel,
        out_shape=jax.ShapeDtypeStruct((nblocks * 8, 128), jnp.float32),
        grid_spec=pltpu.PrefetchScalarGridSpec(
            num_scalar_prefetch=0,
            grid=(nblocks,),
            in_specs=[in_spec, in_spec],
            out_specs=out_spec,
        ),
        compiler_params=_cparams(1),
    )(p, t)
    # Tiny cross-block reduction; XLA fuses it with mean / loss_weight epilogue.
    return jnp.sum(partials)


def _l1_weighted_sums(pred, target, weight):
    """(sum(|pred - target| * weight), sum(weight)) as f32 scalars, one pass."""
    n = pred.size
    lanes, rows, block_rows, padded_n = _slab_plan(n, _sublane(pred, target, weight))
    p = _to_slab(pred, lanes, padded_n)
    t = _to_slab(target, lanes, padded_n)
    w = _to_slab(weight, lanes, padded_n)
    nblocks = rows // block_rows
    in_spec = pl.BlockSpec((block_rows, lanes), lambda i: (i, 0))
    out_spec = pl.BlockSpec((8, 128), lambda i: (i, 0))

    loss_p, w_p = pl.pallas_call(
        _l1_sum_w_kernel,
        out_shape=(jax.ShapeDtypeStruct((nblocks * 8, 128), jnp.float32),
                   jax.ShapeDtypeStruct((nblocks * 8, 128), jnp.float32)),
        grid_spec=pltpu.PrefetchScalarGridSpec(
            num_scalar_prefetch=0,
            grid=(nblocks,),
            in_specs=[in_spec, in_spec, in_spec],
            out_specs=[out_spec, out_spec],
        ),
        compiler_params=_cparams(1),
    )(p, t, w)
    return jnp.sum(loss_p), jnp.sum(w_p)


# ---------------------------------------------------------------------------
# L1Loss module (mirrors the PyTorch semantics)
# ---------------------------------------------------------------------------
class L1Loss:
    """L1 (MAE) loss with Pallas-backed element-wise + reduction hot paths."""

    def __init__(self, loss_weight=1.0, reduction="mean"):
        if reduction not in ("none", "mean", "sum"):
            raise ValueError(f"Unsupported reduction mode: {reduction}. "
                             f"Supported ones are: ['none', 'mean', 'sum']")
        self.loss_weight = loss_weight
        self.reduction = reduction

    def __call__(self, pred, target, weight=None, **kwargs):
        pred = jnp.asarray(pred)
        target = jnp.asarray(target)

        if weight is not None:
            weight = jnp.asarray(weight)
            assert weight.ndim == pred.ndim
            assert weight.shape[1] == 1 or weight.shape[1] == pred.shape[1]
            if weight.shape != pred.shape:
                # Channel-1 weight: broadcast over C.  sum(broadcast weight)
                # equals PyTorch's `weight.sum() * loss.size(1)` normalizer.
                # TODO(synk): stream the compact (N,1,H,W) weight with a
                # structure-aware BlockSpec instead of materializing the
                # broadcast; skipped because the (N,C,HW) relayout it requires
                # costs more than it saves for small channel counts.
                weight = jnp.broadcast_to(weight, pred.shape)

        if self.reduction == "none":
            loss = _l1_elementwise(pred, target, weight)
        else:
            if weight is None:
                out_dtype = jnp.result_type(pred.dtype, target.dtype)
                s = _l1_sum(pred, target)                       # f32 accumulation
                loss = s / pred.size if self.reduction == "mean" else s
            else:
                out_dtype = jnp.result_type(pred.dtype, target.dtype, weight.dtype)
                loss_sum, w_sum = _l1_weighted_sums(pred, target, weight)
                # weight_reduce_loss: 'sum' ignores the normalizer; 'mean'
                # divides by the sum of the (broadcast) weight.
                loss = loss_sum / w_sum if self.reduction == "mean" else loss_sum
            loss = loss.astype(out_dtype)                       # match PyTorch dtype

        return self.loss_weight * loss


# ---------------------------------------------------------------------------
if __name__ == "__main__":
    key = jax.random.PRNGKey(0)
    k1, k2, k3, k4 = jax.random.split(key, 4)

    N, C, H, W = 2, 4, 16, 16
    pred = jax.random.normal(k1, (N, C, H, W), dtype=jnp.float32)
    target = jax.random.normal(k2, (N, C, H, W), dtype=jnp.float32)
    weight = jax.random.uniform(k3, (N, C, H, W), dtype=jnp.float32)
    weight_c1 = jax.random.uniform(k4, (N, 1, H, W), dtype=jnp.float32)

    # mean (default), no weight
    out_mean = jax.block_until_ready(L1Loss(loss_weight=1.0, reduction="mean")(pred, target))
    ref_mean = jnp.mean(jnp.abs(pred - target))
    assert np.allclose(np.asarray(out_mean), np.asarray(ref_mean), rtol=1e-5, atol=1e-5)

    # sum, no weight
    out_sum = jax.block_until_ready(L1Loss(reduction="sum")(pred, target))
    ref_sum = jnp.sum(jnp.abs(pred - target))
    assert np.allclose(np.asarray(out_sum), np.asarray(ref_sum), rtol=1e-5, atol=1e-4)

    # none, no weight
    out_none = jax.block_until_ready(L1Loss(reduction="none")(pred, target))
    ref_none = jnp.abs(pred - target)
    assert out_none.shape == (N, C, H, W)
    assert np.allclose(np.asarray(out_none), np.asarray(ref_none), rtol=1e-6, atol=1e-6)

    # mean with full element-wise weight (normalizer = weight.sum())
    out_wmean = jax.block_until_ready(L1Loss(reduction="mean")(pred, target, weight))
    ref_wmean = jnp.sum(jnp.abs(pred - target) * weight) / jnp.sum(weight)
    assert np.allclose(np.asarray(out_wmean), np.asarray(ref_wmean), rtol=1e-5, atol=1e-5)

    # sum with element-wise weight
    out_wsum = jax.block_until_ready(L1Loss(reduction="sum")(pred, target, weight))
    ref_wsum = jnp.sum(jnp.abs(pred - target) * weight)
    assert np.allclose(np.asarray(out_wsum), np.asarray(ref_wsum), rtol=1e-5, atol=1e-4)

    # mean with channel-1 weight (normalizer = weight.sum() * C, per weight_reduce_loss)
    out_cmean = jax.block_until_ready(L1Loss(reduction="mean")(pred, target, weight_c1))
    ref_cmean = jnp.sum(jnp.abs(pred - target) * weight_c1) / (jnp.sum(weight_c1) * C)
    assert np.allclose(np.asarray(out_cmean), np.asarray(ref_cmean), rtol=1e-5, atol=1e-5)

    # none with weight + loss_weight scaling
    out_wnone = jax.block_until_ready(
        L1Loss(loss_weight=0.5, reduction="none")(pred, target, weight))
    ref_wnone = 0.5 * jnp.abs(pred - target) * weight
    assert np.allclose(np.asarray(out_wnone), np.asarray(ref_wnone), rtol=1e-5, atol=1e-6)

    print("KERNEL_OK")
</pallas_src>

<mosaic_0001>
module attributes {stable_mosaic.version = 11 : i64} {
  func.func @_l1_sum_kernel(%arg0: i32, %arg1: memref<8x256xf32, #tpu.memory_space<vmem>>, %arg2: memref<8x256xf32, #tpu.memory_space<vmem>>, %arg3: memref<8x128xf32, #tpu.memory_space<vmem>>) attributes {dimension_semantics = [#tpu.dimension_semantics<parallel>], iteration_bounds = array<i64: 1>, scalar_prefetch = 0 : i64, scratch_operands = 0 : i64, tpu.core_type = #tpu.core_type<tc>, window_params = [{transform_indices = @transform_0, window_bounds = array<i64: 8, 256>}, {transform_indices = @transform_1, window_bounds = array<i64: 8, 256>}, {transform_indices = @transform_2, window_bounds = array<i64: 8, 128>}]} {
    %c0 = arith.constant 0 : index
    %c0_0 = arith.constant 0 : index
    %0 = vector.load %arg1[%c0, %c0_0] : memref<8x256xf32, #tpu.memory_space<vmem>>, vector<8x256xf32>
    %c0_1 = arith.constant 0 : index
    %c0_2 = arith.constant 0 : index
    %1 = vector.load %arg2[%c0_1, %c0_2] : memref<8x256xf32, #tpu.memory_space<vmem>>, vector<8x256xf32>
    %2 = arith.subf %0, %1 : vector<8x256xf32>
    %3 = math.absf %2 : vector<8x256xf32>
    %4 = vector.extract_strided_slice %3 {offsets = [0, 0], sizes = [8, 128], strides = [1, 1]} : vector<8x256xf32> to vector<8x128xf32>
    %5 = vector.extract_strided_slice %3 {offsets = [0, 128], sizes = [8, 128], strides = [1, 1]} : vector<8x256xf32> to vector<8x128xf32>
    %6 = arith.addf %4, %5 : vector<8x128xf32>
    %c0_3 = arith.constant 0 : index
    %c0_4 = arith.constant 0 : index
    %7 = vector.load %arg3[%c0_3, %c0_4] : memref<8x128xf32, #tpu.memory_space<vmem>>, vector<8x128xf32>
    tpu.vector_store %arg3[%c0_3, %c0_4], %6 {strides = array<i32>} : memref<8x128xf32, #tpu.memory_space<vmem>>, vector<8x128xf32>,
    return
  }
  func.func @transform_0(%arg0: i32) -> (i32, i32) {
    %c0_i32 = arith.constant 0 : i32
    %c0_i32_0 = arith.constant 0 : i32
    return %arg0, %c0_i32 : i32, i32
  }
  func.func @transform_1(%arg0: i32) -> (i32, i32) {
    %c0_i32 = arith.constant 0 : i32
    %c0_i32_0 = arith.constant 0 : i32
    return %arg0, %c0_i32 : i32, i32
  }
  func.func @transform_2(%arg0: i32) -> (i32, i32) {
    %c0_i32 = arith.constant 0 : i32
    %c0_i32_0 = arith.constant 0 : i32
    return %arg0, %c0_i32 : i32, i32
  }
}

</mosaic_0001>

<llo_original>
// kernel: tpu_custom_call.1
$region0: #{tpu_custom_call.1}
  #allocation0 [shape = 'u32[]', space=smem, size = 0x4, offset = 0x4, fixed_abs, tag = 'smem constant byte address 0x4 - core index']
  #allocation1 [shape = 'u32[144,128]{1,0:T(1,128)}', space=vmem, size = 0x12000, scoped, tag = 'internal scratch']
  %s0 = inlined_call_operand.hbm [shape: f32[8,256], index: 0, kind: input, shape index: {}]
  %s1 = inlined_call_operand.hbm [shape: f32[8,256], index: 1, kind: input, shape index: {}]
  %s2 = inlined_call_operand.hbm [shape: f32[8,128], index: 2, kind: output, shape index: {}]
  %s3 = sld [smem:[#allocation0]]
  $region26: #{tpu_custom_call.1} parent=0
    _
  %s5 = ssub.s32 1, %s3
  %s6 = scalar_select 0, %s5, %s3
  $region1: #{tpu_custom_call.1} parent=0
    #allocation2 [shape = 'u8[8192]{0}', space=vmem, size = 0x2000, scoped, tag = 'input window, operand 0, single buffered']
    #allocation3 [shape = 's32[1]{0}', space=sflag, size = 0x4, scoped, tag = 'scoped memory for tpu_custom_call.1']
    #allocation4 [shape = 's32[1]{0}', space=sflag, size = 0x4, scoped, tag = 'scoped memory for tpu_custom_call.1']
    #allocation5 [shape = 'u8[8192]{0}', space=vmem, size = 0x2000, scoped, tag = 'input window, operand 1, single buffered']
    #allocation6 [shape = 's32[1]{0}', space=sflag, size = 0x4, scoped, tag = 'scoped memory for tpu_custom_call.1']
    #allocation7 [shape = 'u8[4096]{0}', space=vmem, size = 0x1000, scoped, tag = 'output window, operand 0, single buffered']
    %7 = vsyncpa [#allocation3], 0
    %8 = vsyncpa [#allocation6], 0
    %9 = vsyncpa [#allocation4], 0
    // Predicated region
    $region2: #{tpu_custom_call.1} parent=1 // pred_check
      _
    $region3: #{tpu_custom_call.1} parent=1 // pred_check_branch
      %11 = sbr.rel (0) target = $region5
    $region4: #{tpu_custom_call.1} parent=1 // pred_region
      %s13 = ssub.s32 256, 256
      %14 = vsyncadd [#allocation3], %s13
      %s16 = sshll.u32 [#allocation2], 4
      %s17 = int_to_ptr.vmem [resolvable:$true] %s16
      %19 = dma.hbm_to_vmem [thread:$0]  %s0, 256, %s17, [#allocation3]
    $region5: #{tpu_custom_call.1} parent=1 // pred_fallthru
      _
    // Predicated region
    $region6: #{tpu_custom_call.1} parent=1 // pred_check
      _
    $region7: #{tpu_custom_call.1} parent=1 // pred_check_branch
      %21 = sbr.rel (0) target = $region9
    $region8: #{tpu_custom_call.1} parent=1 // pred_region
      %s23 = ssub.s32 256, 256
      %24 = vsyncadd [#allocation6], %s23
      %s26 = sshll.u32 [#allocation5], 4
      %s27 = int_to_ptr.vmem [resolvable:$true] %s26
      %29 = dma.hbm_to_vmem [thread:$0]  %s1, 256, %s27, [#allocation6]
    $region9: #{tpu_custom_call.1} parent=1 // pred_fallthru
      _
    // Predicated region
    $region10: #{tpu_custom_call.1} parent=1 // pred_check
      _
    $region11: #{tpu_custom_call.1} parent=1 // pred_check_branch
      %31 = sbr.rel (0) target = $region13
    $region12: #{tpu_custom_call.1} parent=1 // pred_region
      %32 = dma.done [#allocation3], 256
    $region13: #{tpu_custom_call.1} parent=1 // pred_fallthru
      _
    // Predicated region
    $region14: #{tpu_custom_call.1} parent=1 // pred_check
      _
    $region15: #{tpu_custom_call.1} parent=1 // pred_check_branch
      %34 = sbr.rel (0) target = $region17
    $region16: #{tpu_custom_call.1} parent=1 // pred_region
      %35 = dma.done [#allocation6], 256
    $region17: #{tpu_custom_call.1} parent=1 // pred_fallthru
      _
    %v36 = vld [vmem:[#allocation2] sm:$0xff]
    %v37 = vld [vmem:[#allocation2 + $0x8] sm:$0xff]
    %v38 = vld [vmem:[#allocation5] sm:$0xff]
    %v39 = vld [vmem:[#allocation5 + $0x8] sm:$0xff]
    %v40 = vsub.f32 %v36, %v38
    %v41 = vsub.f32 %v37, %v39
    %v42 = vand.u32 2147483647, %v40
    %v43 = vand.u32 2147483647, %v41
    %v44 = vadd.f32 %v42, %v43
    %45 = vst [vmem:[#allocation7] sm:$0xff] %v44
    // Predicated region
    $region18: #{tpu_custom_call.1} parent=1 // pred_check
      _
    $region19: #{tpu_custom_call.1} parent=1 // pred_check_branch
      %47 = sbr.rel (0) target = $region21
    $region20: #{tpu_custom_call.1} parent=1 // pred_region
      %s49 = ssub.s32 128, 128
      %50 = vsyncadd [#allocation4], %s49
      %s52 = sshll.u32 [#allocation7], 4
      %s53 = int_to_ptr.vmem [resolvable:$true] %s52
      %55 = dma.vmem_to_hbm [thread:$0]  %s53, 128, %s2, [#allocation4]
    $region21: #{tpu_custom_call.1} parent=1 // pred_fallthru
      _
    // Predicated region
    $region22: #{tpu_custom_call.1} parent=1 // pred_check
      _
    $region23: #{tpu_custom_call.1} parent=1 // pred_check_branch
      %57 = sbr.rel (0) target = $region25
    $region24: #{tpu_custom_call.1} parent=1 // pred_region
      %58 = dma.done [#allocation4], 128
    $region25: #{tpu_custom_call.1} parent=1 // pred_fallthru
      _
    %59 = vsyncpa [#allocation3], 1
    %60 = vsyncpa [#allocation6], 1
    %61 = vsyncpa [#allocation4], 1

</llo_original>
